<compile_context>
chip_gen: v7x
topology: tpu7x:2x2x1
jax: 0.10.0
libtpu: 0.0.40
codegen_flags: <defaults>
</compile_context>

<pallas_src>
import functools

import jax
import jax.numpy as jnp
from jax.experimental import pallas as pl
from jax.experimental.pallas import tpu as pltpu


def _round_up(x, m):
    return (x + m - 1) // m * m


# ----------------------------- Pallas kernel -------------------------------

def _moe_kernel(mask_ref, x_ref, w1_ref, w3_ref, w2_ref, rw_ref,
                o_ref, acc_ref):
    """Grid: (token_tile ti [parallel], expert e, ffn_tile f).

    e and f reduce into the resident f32 accumulator; the output block is
    written once on the last (e, f) step.
    """
    ti = pl.program_id(0)
    e = pl.program_id(1)
    f = pl.program_id(2)
    n_e = pl.num_programs(1)
    n_f = pl.num_programs(2)

    @pl.when((e == 0) & (f == 0))
    def _():
        acc_ref[...] = jnp.zeros_like(acc_ref)

    # Skip this expert's compute if no token in this tile routed to it.
    # (Weight tiles are still prefetched by the pipeline; see grouped-dispatch
    # TODO at the top of the file.)
    @pl.when(mask_ref[ti * n_e + e] > 0)
    def _():
        x = x_ref[...]                                        # (tm, H) bf16
        g = jnp.dot(x, w1_ref[0], preferred_element_type=jnp.float32)
        u = jnp.dot(x, w3_ref[0], preferred_element_type=jnp.float32)
        h = (g * jax.nn.sigmoid(g)) * u                       # SiLU(xW1)*(xW3), f32
        h = h * rw_ref[0]                                     # fold routing weight (tm, 1)
        acc_ref[...] += jnp.dot(h.astype(x.dtype), w2_ref[0],
                                preferred_element_type=jnp.float32)

    @pl.when((e == n_e - 1) & (f == n_f - 1))
    def _():
        o_ref[...] = acc_ref[...].astype(o_ref.dtype)


# ------------------------------- wrapper ------------------------------------

@functools.partial(jax.jit, static_argnames=("top_k",))
def mixtral_sparse_moe_block(hidden_states, selected_experts,
                             gate_w_t, w1, w3, w2, *, top_k):
    """hidden_states: (B, S, H); selected_experts: (B, S, top_k) int32.
    gate_w_t: (H, E) (gate.weight pre-transposed); w1/w3: (E, H, F); w2: (E, F, H).
    Returns (final_hidden_states (B, S, H), router_logits (B*S, E))."""
    B, S, H = hidden_states.shape
    E = gate_w_t.shape[1]
    F = w1.shape[-1]
    T = B * S
    out_dtype = hidden_states.dtype
    compute_dtype = jnp.bfloat16          # bf16 MXU inputs, f32 accumulation

    x = hidden_states.reshape(T, H)

    # ---- router gate + routing glue (tiny; plain JAX/XLA) ----
    router_logits = jnp.dot(x.astype(jnp.float32), gate_w_t.astype(jnp.float32),
                            precision=jax.lax.Precision.HIGHEST)
    probs = jax.nn.softmax(router_logits, axis=-1)
    sel = selected_experts.reshape(T, top_k)
    gathered = jnp.take_along_axis(probs, sel, axis=-1)                 # (T, K)
    norm = gathered / jnp.sum(gathered, axis=-1, keepdims=True)
    norm = norm.astype(out_dtype).astype(jnp.float32)  # mimic torch .to(hidden dtype)
    one_hot = jax.nn.one_hot(sel, E, dtype=jnp.float32)                 # (T, K, E)
    # Dense per-(token, expert) combine weight (sums duplicates, matching
    # torch index_add_ semantics). Zero weight for non-selected experts.
    dense_w = jnp.einsum('tk,tke->te', norm, one_hot)                   # (T, E)
    counts = jnp.sum(one_hot, axis=1)                                   # (T, E)

    # ---- tile sizes (sized for v7x's 64 MiB VMEM; v5e/v6e fit comfortably;
    #      consider tm=128 on v5e, tf=2048 / Buffered(3) on v6e) ----
    tm = 256 if T >= 256 else _round_up(T, 8)
    Tp = _round_up(T, tm)
    if F > 1024 and F % 1024 == 0:
        tf = 1024
    elif F > 512 and F % 512 == 0:
        tf = 512
    else:
        tf = F
    nt = Tp // tm
    nf = F // tf

    if Tp > T:
        x = jnp.pad(x, ((0, Tp - T), (0, 0)))
        dense_w = jnp.pad(dense_w, ((0, Tp - T), (0, 0)))
        counts = jnp.pad(counts, ((0, Tp - T), (0, 0)))

    x_bf = x.astype(compute_dtype)
    w1_bf = w1.astype(compute_dtype)
    w3_bf = w3.astype(compute_dtype)
    w2_bf = w2.astype(compute_dtype)
    # Per-expert routing weights as (E, Tp, 1) f32 tile-sized blocks; the
    # weight is multiplied into h (pre-W2), so no per-expert (tm, H) multiply.
    rw = jnp.transpose(dense_w)[:, :, None]                             # (E, Tp, 1)
    # Per-(token-tile, expert) occupancy for the compute-skip (1-D SMEM).
    tile_mask = counts.reshape(nt, tm, E).sum(axis=1)                   # (nt, E)
    tile_mask = tile_mask.reshape(-1).astype(jnp.int32)                 # (nt*E,)

    cost = pl.CostEstimate(
        flops=int(2 * 3 * T * top_k * H * F),
        transcendentals=int(T * top_k * F),
        bytes_accessed=int(2 * 3 * E * H * F + 2 * Tp * H + 4 * Tp * H),
    )

    grid_spec = pltpu.PrefetchScalarGridSpec(
        num_scalar_prefetch=1,
        grid=(nt, E, nf),
        in_specs=[
            pl.BlockSpec((tm, H), lambda ti, e, f, m: (ti, 0)),
            pl.BlockSpec((1, H, tf), lambda ti, e, f, m: (e, 0, f)),
            pl.BlockSpec((1, H, tf), lambda ti, e, f, m: (e, 0, f)),
            pl.BlockSpec((1, tf, H), lambda ti, e, f, m: (e, f, 0)),
            pl.BlockSpec((1, tm, 1), lambda ti, e, f, m: (e, ti, 0)),
        ],
        out_specs=pl.BlockSpec((tm, H), lambda ti, e, f, m: (ti, 0)),
        scratch_shapes=[pltpu.VMEM((tm, H), jnp.float32)],
    )

    out_p = pl.pallas_call(
        _moe_kernel,
        out_shape=jax.ShapeDtypeStruct((Tp, H), out_dtype),
        grid_spec=grid_spec,
        compiler_params=pltpu.CompilerParams(
            dimension_semantics=("parallel", "arbitrary", "arbitrary"),
            vmem_limit_bytes=48 * 1024 * 1024),
        cost_estimate=cost,
    )(tile_mask, x_bf, w1_bf, w3_bf, w2_bf, rw)

    out = out_p[:T].reshape(B, S, H)
    return out, router_logits


# ------------------------- pure-JAX reference check -------------------------

def _reference(hidden_states, selected_experts, gate_w_t, w1, w3, w2, top_k):
    B, S, H = hidden_states.shape
    T = B * S
    hp = jax.lax.Precision.HIGHEST
    x = hidden_states.reshape(T, H).astype(jnp.float32)
    logits = jnp.dot(x, gate_w_t.astype(jnp.float32), precision=hp)
    probs = jax.nn.softmax(logits, axis=-1)
    sel = selected_experts.reshape(T, top_k)
    g = jnp.take_along_axis(probs, sel, axis=-1)
    nw = g / g.sum(-1, keepdims=True)
    out = jnp.zeros((T, H), jnp.float32)
    for k in range(top_k):
        e_ids = sel[:, k]
        a = jnp.einsum('th,thf->tf', x, w1[e_ids], precision=hp)
        b = jnp.einsum('th,thf->tf', x, w3[e_ids], precision=hp)
        h = (a * jax.nn.sigmoid(a)) * b
        y = jnp.einsum('tf,tfh->th', h, w2[e_ids], precision=hp)
        out = out + nw[:, k:k + 1] * y
    return out.reshape(B, S, H), logits


if __name__ == "__main__":
    # Small, MoE-consistent shapes.
    batch, seq, hidden, ffn = 2, 8, 32, 64
    num_experts, top_k = 4, 2

    key = jax.random.PRNGKey(0)
    k_x, k_g, k_w1, k_w3, k_w2, k_sel = jax.random.split(key, 6)

    hidden_states = jax.random.normal(k_x, (batch, seq, hidden), jnp.float32)
    gate_w_t = jax.random.normal(k_g, (hidden, num_experts), jnp.float32) * 0.1
    w1 = jax.random.normal(k_w1, (num_experts, hidden, ffn), jnp.float32) * 0.1
    w3 = jax.random.normal(k_w3, (num_experts, hidden, ffn), jnp.float32) * 0.1
    w2 = jax.random.normal(k_w2, (num_experts, ffn, hidden), jnp.float32) * 0.1
    selected_experts = jax.random.randint(
        k_sel, (batch, seq, top_k), 0, num_experts, dtype=jnp.int32)

    out, logits = mixtral_sparse_moe_block(
        hidden_states, selected_experts, gate_w_t, w1, w3, w2, top_k=top_k)
    out = jax.block_until_ready(out)
    logits = jax.block_until_ready(logits)

    ref_out, ref_logits = _reference(
        hidden_states, selected_experts, gate_w_t, w1, w3, w2, top_k)
    assert jnp.allclose(logits, ref_logits, atol=1e-4, rtol=1e-4), "logits mismatch"
    # Kernel uses bf16 MXU inputs with f32 accumulation -> bf16-level tolerance.
    err = float(jnp.max(jnp.abs(out - ref_out)))
    assert jnp.allclose(out, ref_out, atol=5e-2, rtol=5e-2), f"max abs err {err}"
    print("KERNEL_OK")
</pallas_src>

<mosaic_0001>
module attributes {stable_mosaic.version = 11 : i64} {
  func.func @_moe_kernel(%arg0: i32, %arg1: i32, %arg2: i32, %arg3: memref<4xi32, #tpu.memory_space<smem>>, %arg4: memref<16x32xbf16, #tpu.memory_space<vmem>>, %arg5: memref<1x32x64xbf16, #tpu.memory_space<vmem>>, %arg6: memref<1x32x64xbf16, #tpu.memory_space<vmem>>, %arg7: memref<1x64x32xbf16, #tpu.memory_space<vmem>>, %arg8: memref<1x16x1xf32, #tpu.memory_space<vmem>>, %arg9: memref<16x32xf32, #tpu.memory_space<vmem>>, %arg10: memref<16x32xf32, #tpu.memory_space<vmem>>) attributes {dimension_semantics = [#tpu.dimension_semantics<parallel>, #tpu.dimension_semantics<arbitrary>, #tpu.dimension_semantics<arbitrary>], iteration_bounds = array<i64: 1, 4, 1>, scalar_prefetch = 1 : i64, scratch_operands = 1 : i64, tpu.core_type = #tpu.core_type<tc>, window_params = [{transform_indices = @transform_0, window_bounds = array<i64: 16, 32>}, {transform_indices = @transform_1, window_bounds = array<i64: 1, 32, 64>}, {transform_indices = @transform_2, window_bounds = array<i64: 1, 32, 64>}, {transform_indices = @transform_3, window_bounds = array<i64: 1, 64, 32>}, {transform_indices = @transform_4, window_bounds = array<i64: 1, 16, 1>}, {transform_indices = @transform_5, window_bounds = array<i64: 16, 32>}]} {
    %c0_i32 = arith.constant 0 : i32
    %0 = arith.cmpi eq, %arg1, %c0_i32 : i32
    %c0_i32_0 = arith.constant 0 : i32
    %1 = arith.cmpi eq, %arg2, %c0_i32_0 : i32
    %2 = arith.andi %0, %1 : i1
    %3 = arith.extui %2 : i1 to i32
    %c0_i32_1 = arith.constant 0 : i32
    %4 = arith.cmpi ne, %3, %c0_i32_1 : i32
    scf.if %4 {
      %cst = arith.constant 0.000000e+00 : f32
      %17 = vector.broadcast %cst : f32 to vector<16x32xf32>
      %c0 = arith.constant 0 : index
      %c0_6 = arith.constant 0 : index
      %18 = vector.load %arg10[%c0, %c0_6] : memref<16x32xf32, #tpu.memory_space<vmem>>, vector<16x32xf32>
      tpu.vector_store %arg10[%c0, %c0_6], %17 {strides = array<i32>} : memref<16x32xf32, #tpu.memory_space<vmem>>, vector<16x32xf32>,
    } else {
    }
    %c4_i32 = arith.constant 4 : i32
    %5 = arith.muli %arg0, %c4_i32 : i32
    %6 = arith.addi %5, %arg1 : i32
    %7 = arith.index_cast %6 : i32 to index
    %8 = memref.load %arg3[%7] : memref<4xi32, #tpu.memory_space<smem>>
    %c0_i32_2 = arith.constant 0 : i32
    %9 = arith.cmpi sgt, %8, %c0_i32_2 : i32
    %10 = arith.extui %9 : i1 to i32
    %c0_i32_3 = arith.constant 0 : i32
    %11 = arith.cmpi ne, %10, %c0_i32_3 : i32
    scf.if %11 {
      %c0 = arith.constant 0 : index
      %c0_6 = arith.constant 0 : index
      %17 = vector.load %arg4[%c0, %c0_6] : memref<16x32xbf16, #tpu.memory_space<vmem>>, vector<16x32xbf16>
      %c0_7 = arith.constant 0 : index
      %c0_8 = arith.constant 0 : index
      %c0_9 = arith.constant 0 : index
      %18 = vector.load %arg5[%c0_7, %c0_8, %c0_9] : memref<1x32x64xbf16, #tpu.memory_space<vmem>>, vector<1x32x64xbf16>
      %19 = vector.shape_cast %18 : vector<1x32x64xbf16> to vector<32x64xbf16>
      %cst = arith.constant dense<0.000000e+00> : vector<16x64xf32>
      %20 = tpu.matmul %17, %19, %cst {dimension_numbers = #tpu.dot_dimension_numbers<[1], [0], [0], [1], [0, 0, 1, 1], [], []>} : vector<16x32xbf16>, vector<32x64xbf16>, vector<16x64xf32> -> vector<16x64xf32>
      %c0_10 = arith.constant 0 : index
      %c0_11 = arith.constant 0 : index
      %c0_12 = arith.constant 0 : index
      %21 = vector.load %arg6[%c0_10, %c0_11, %c0_12] : memref<1x32x64xbf16, #tpu.memory_space<vmem>>, vector<1x32x64xbf16>
      %22 = vector.shape_cast %21 : vector<1x32x64xbf16> to vector<32x64xbf16>
      %cst_13 = arith.constant dense<0.000000e+00> : vector<16x64xf32>
      %23 = tpu.matmul %17, %22, %cst_13 {dimension_numbers = #tpu.dot_dimension_numbers<[1], [0], [0], [1], [0, 0, 1, 1], [], []>} : vector<16x32xbf16>, vector<32x64xbf16>, vector<16x64xf32> -> vector<16x64xf32>
      %24 = arith.negf %20 : vector<16x64xf32>
      %25 = math.exp %24 : vector<16x64xf32>
      %cst_14 = arith.constant 1.000000e+00 : f32
      %26 = vector.broadcast %cst_14 : f32 to vector<16x64xf32>
      %27 = arith.addf %26, %25 : vector<16x64xf32>
      %28 = arith.divf %26, %27 : vector<16x64xf32>
      %29 = arith.mulf %20, %28 : vector<16x64xf32>
      %30 = arith.mulf %29, %23 : vector<16x64xf32>
      %c0_15 = arith.constant 0 : index
      %c0_16 = arith.constant 0 : index
      %c0_17 = arith.constant 0 : index
      %31 = vector.load %arg8[%c0_15, %c0_16, %c0_17] : memref<1x16x1xf32, #tpu.memory_space<vmem>>, vector<1x16x1xf32>
      %32 = vector.shape_cast %31 : vector<1x16x1xf32> to vector<16x1xf32>
      %33 = vector.broadcast %32 : vector<16x1xf32> to vector<16x64xf32>
      %34 = arith.mulf %30, %33 : vector<16x64xf32>
      %c0_18 = arith.constant 0 : index
      %c0_19 = arith.constant 0 : index
      %35 = vector.load %arg10[%c0_18, %c0_19] : memref<16x32xf32, #tpu.memory_space<vmem>>, vector<16x32xf32>
      %36 = arith.truncf %34 : vector<16x64xf32> to vector<16x64xbf16>
      %c0_20 = arith.constant 0 : index
      %c0_21 = arith.constant 0 : index
      %c0_22 = arith.constant 0 : index
      %37 = vector.load %arg7[%c0_20, %c0_21, %c0_22] : memref<1x64x32xbf16, #tpu.memory_space<vmem>>, vector<1x64x32xbf16>
      %38 = vector.shape_cast %37 : vector<1x64x32xbf16> to vector<64x32xbf16>
      %cst_23 = arith.constant dense<0.000000e+00> : vector<16x32xf32>
      %39 = tpu.matmul %36, %38, %cst_23 {dimension_numbers = #tpu.dot_dimension_numbers<[1], [0], [0], [1], [0, 0, 1, 1], [], []>} : vector<16x64xbf16>, vector<64x32xbf16>, vector<16x32xf32> -> vector<16x32xf32>
      %40 = arith.addf %35, %39 : vector<16x32xf32>
      %c0_24 = arith.constant 0 : index
      %c0_25 = arith.constant 0 : index
      %41 = vector.load %arg10[%c0_24, %c0_25] : memref<16x32xf32, #tpu.memory_space<vmem>>, vector<16x32xf32>
      tpu.vector_store %arg10[%c0_24, %c0_25], %40 {strides = array<i32>} : memref<16x32xf32, #tpu.memory_space<vmem>>, vector<16x32xf32>,
    } else {
    }
    %c3_i32 = arith.constant 3 : i32
    %12 = arith.cmpi eq, %arg1, %c3_i32 : i32
    %c0_i32_4 = arith.constant 0 : i32
    %13 = arith.cmpi eq, %arg2, %c0_i32_4 : i32
    %14 = arith.andi %12, %13 : i1
    %15 = arith.extui %14 : i1 to i32
    %c0_i32_5 = arith.constant 0 : i32
    %16 = arith.cmpi ne, %15, %c0_i32_5 : i32
    scf.if %16 {
      %c0 = arith.constant 0 : index
      %c0_6 = arith.constant 0 : index
      %17 = vector.load %arg10[%c0, %c0_6] : memref<16x32xf32, #tpu.memory_space<vmem>>, vector<16x32xf32>
      %c0_7 = arith.constant 0 : index
      %c0_8 = arith.constant 0 : index
      %18 = vector.load %arg9[%c0_7, %c0_8] : memref<16x32xf32, #tpu.memory_space<vmem>>, vector<16x32xf32>
      tpu.vector_store %arg9[%c0_7, %c0_8], %17 {strides = array<i32>} : memref<16x32xf32, #tpu.memory_space<vmem>>, vector<16x32xf32>,
    } else {
    }
    return
  }
  func.func @transform_0(%arg0: i32, %arg1: i32, %arg2: i32, %arg3: memref<4xi32, #tpu.memory_space<smem>>) -> (i32, i32) {
    %c0_i32 = arith.constant 0 : i32
    %c0_i32_0 = arith.constant 0 : i32
    return %arg0, %c0_i32 : i32, i32
  }
  func.func @transform_1(%arg0: i32, %arg1: i32, %arg2: i32, %arg3: memref<4xi32, #tpu.memory_space<smem>>) -> (i32, i32, i32) {
    %c0_i32 = arith.constant 0 : i32
    %c0_i32_0 = arith.constant 0 : i32
    return %arg1, %c0_i32, %arg2 : i32, i32, i32
  }
  func.func @transform_2(%arg0: i32, %arg1: i32, %arg2: i32, %arg3: memref<4xi32, #tpu.memory_space<smem>>) -> (i32, i32, i32) {
    %c0_i32 = arith.constant 0 : i32
    %c0_i32_0 = arith.constant 0 : i32
    return %arg1, %c0_i32, %arg2 : i32, i32, i32
  }
  func.func @transform_3(%arg0: i32, %arg1: i32, %arg2: i32, %arg3: memref<4xi32, #tpu.memory_space<smem>>) -> (i32, i32, i32) {
    %c0_i32 = arith.constant 0 : i32
    %c0_i32_0 = arith.constant 0 : i32
    return %arg1, %arg2, %c0_i32 : i32, i32, i32
  }
  func.func @transform_4(%arg0: i32, %arg1: i32, %arg2: i32, %arg3: memref<4xi32, #tpu.memory_space<smem>>) -> (i32, i32, i32) {
    %c0_i32 = arith.constant 0 : i32
    %c0_i32_0 = arith.constant 0 : i32
    return %arg1, %arg0, %c0_i32 : i32, i32, i32
  }
  func.func @transform_5(%arg0: i32, %arg1: i32, %arg2: i32, %arg3: memref<4xi32, #tpu.memory_space<smem>>) -> (i32, i32) {
    %c0_i32 = arith.constant 0 : i32
    %c0_i32_0 = arith.constant 0 : i32
    return %arg0, %c0_i32 : i32, i32
  }
}

</mosaic_0001>

<llo_original>
// kernel: div.13
$region0: #{div.13}
  %s0 = inlined_call_operand.vmem [shape: f32[2,8], index: 0, kind: input, shape index: {}]
  %s1 = inlined_call_operand.vmem [shape: f32[16], index: 1, kind: output, shape index: {}]
  $region1: #{div.13} parent=0
    #allocation0 [shape = 'u8[4096]{0}', space=vmem, size = 0x1000, scoped, tag = 'scoped mem for output reshape']
    #allocation1 [shape = 'u8[4096]{0}', space=vmem, size = 0x1000, scoped, tag = 'scoped mem for input reshape']
    %s3 = sshllo.u32 0, 2
    %v4 = vld [vmem:[%s0] sm:%s3]
    %5 = vst [vmem:[#allocation1] sm:%s3] %v4
    %v6 = vld [vmem:[#allocation1] sm:$0x1]
    %vm7 = vcmask 64512
    %8 = vst.msk [vmem:[#allocation0] sm:$0x1] %vm7, %v6
    %s9 = scalar_lea.vmem [#allocation1], 1
    %v10 = vld [vmem:[%s9] sm:$0x1]
    %11 = vrot.lane.b32.xlu0 %v10, 8
    %v12 = vpop.permute.xlu0 %11
    %vm13 = vcmask 130112
    %14 = vst.msk [vmem:[#allocation0] sm:$0x1] %vm13, %v12
    %s16 = sshllo.u32 0, 1
    %v18 = vld [vmem:[#allocation0] sm:%s16]
    %s19 = sshllo.u32 0, 1
    %20 = vst [vmem:[%s1] sm:%s19] %v18

// kernel: eq.1
$region0: #{eq.1}
  %s0 = inlined_call_operand.vmem [shape: s32[2,8,2], index: 0, kind: input, shape index: {}]
  %s1 = inlined_call_operand.vmem [shape: s32[16,2], index: 1, kind: output, shape index: {}]
  $region1: #{eq.1} parent=0
    #allocation0 [shape = 'u8[4096]{0}', space=vmem, size = 0x1000, scoped, tag = 'scoped mem for output reshape']
    #allocation1 [shape = 'u8[8192]{0}', space=vmem, size = 0x2000, scoped, tag = 'scoped mem for input reshape']
    %s3 = sshllo.u32 0, 2
    %s4 = scalar_lea.vmem %s0, 2
    %v5 = vld [vmem:[%s4] sm:%s3]
    %s6 = scalar_lea.vmem [#allocation1], 8
    %7 = vst [vmem:[%s6] sm:%s3] %v5
    %v8 = vld [vmem:[%s0] sm:%s3]
    %9 = vst [vmem:[#allocation1] sm:%s3] %v8
    %s10 = smov 3
    %v11 = vld [vmem:[#allocation1] ss:$8 sm:%s10]
    %vm12 = vcmask 64512
    %13 = vst.msk [vmem:[#allocation0] sm:$0x3] %vm12, %v11
    %s14 = scalar_lea.vmem [#allocation1], 1
    %s15 = smov 3
    %v16 = vld [vmem:[%s14] ss:$8 sm:%s15]
    %17 = vrot.lane.b32.xlu0 %v16, 8
    %v18 = vpop.permute.xlu0 %17
    %vm19 = vcmask 130112
    %20 = vst.msk [vmem:[#allocation0] sm:$0x3] %vm19, %v18
    %s22 = sshllo.u32 0, 2
    %v24 = vld [vmem:[#allocation0] sm:%s22]
    %s25 = sshllo.u32 0, 2
    %26 = vst [vmem:[%s1] sm:%s25] %v24

// kernel: mixtral_sparse_moe_block.1
$region0: #{mixtral_sparse_moe_block.1}
  #allocation0 [shape = 'u32[]', space=smem, size = 0x4, offset = 0x4, fixed_abs, tag = 'smem constant byte address 0x4 - core index']
  #allocation1 [shape = 'u32[144,128]{1,0:T(1,128)}', space=vmem, size = 0x12000, scoped, tag = 'internal scratch']
  #allocation2 [shape = 'f32[16,32]{1,0:T(8,128)}', space=vmem, size = 0x2000, scoped, tag = 'scratch operand']
  #allocation3 [shape = 's32[1]{0}', space=sflag, size = 0x4, scoped, tag = 'scoped memory for mixtral_sparse_moe_block.1']
  #allocation4 [shape = 'u8[512]{0}', space=smem, size = 0x200, scoped, tag = 'prefetched SMEM operand 0']
  %s0 = inlined_call_operand.vmem [shape: s32[4], index: 0, kind: input, shape index: {}]
  %s1 = inlined_call_operand.vmem [shape: bf16[16,32], index: 1, kind: input, shape index: {}]
  %s2 = inlined_call_operand.vmem [shape: bf16[4,32,64], index: 2, kind: input, shape index: {}]
  %s3 = inlined_call_operand.vmem [shape: bf16[4,32,64], index: 3, kind: input, shape index: {}]
  %s4 = inlined_call_operand.vmem [shape: bf16[4,64,32], index: 4, kind: input, shape index: {}]
  %s5 = inlined_call_operand.vmem [shape: f32[4,16,1], index: 5, kind: input, shape index: {}]
  %s6 = inlined_call_operand.hbm [shape: f32[16,32], index: 6, kind: output, shape index: {}]
  %s7 = sld [smem:[#allocation0]]
  $region65: #{mixtral_sparse_moe_block.1} parent=0
    _
  %s9 = ssub.s32 1, %s7
  %s10 = scalar_select 0, %s9, %s7
  %s11 = sshll.u32 %s0, 4
  %s12 = int_to_ptr.vmem [resolvable:$true] %s11
  %14 = dma.vmem_to_smem %s12, 16, [#allocation4], [#allocation3]
  %15 = dma.done [#allocation3], 16
  %16 = sfence
  $region1: #{mixtral_sparse_moe_block.1} parent=0
    #allocation5 [shape = 'u8[8192]{0}', space=vmem, size = 0x2000, scoped, tag = 'output window, operand 0, single buffered']
    #allocation6 [shape = 's32[2]{0}', space=sflag, size = 0x8, scoped, tag = 'scoped memory for mixtral_sparse_moe_block.1']
    %17 = vsyncpa [#allocation6], 0
    loop: start=0, step=1, limit=6
    $region2: #{mixtral_sparse_moe_block.1} parent=1 // loop_pre_header
      _
    $region3: #{mixtral_sparse_moe_block.1} parent=1 // loop_header
      %s19 = sphi 0, %s23
      %p20 = scmp.ge.s32.totalorder %s19, 6
      %s26 = sphi 0, %s45
      %s27 = sphi 0, %s41
      %s28 = sphi 0, %s37
      %s29 = sphi 0, %s26
      %s30 = sphi 0, %s27
      %s31 = sphi 0, %s28
      %s32 = sphi 0, %s29
      %s33 = sphi 0, %s30
      %s34 = sphi 0, %s31
      %s48 = sphi 0, %s50
      %s51 = sphi 0, %s48
      %s52 = sphi 0, %s51
      %s68 = sphi 0, %s52
      %s76 = sphi 0, %s78
      %s79 = sphi 0, %s76
      %s80 = sphi 0, %s79
      %s96 = sphi 0, %s80
      %s104 = sphi 0, %s106
      %s107 = sphi 0, %s104
      %s108 = sphi 0, %s107
      %s124 = sphi 0, %s108
      %s132 = sphi 0, %s134
      %s135 = sphi 0, %s132
      %s136 = sphi 0, %s135
      %s152 = sphi 0, %s136
      %s160 = sphi 0, %s162
      %s163 = sphi 0, %s160
      %s164 = sphi 0, %s163
      %s180 = sphi 0, %s164
      %s186 = sphi 0, %s188
      %s189 = sphi 0, %s186
      %s190 = sphi 0, %s189
      %s206 = sphi 0, %s190
    $region4: #{mixtral_sparse_moe_block.1} parent=1 // loop_header_branch
      %22 = sbr.rel (%p20) target = $region8
    $region5: #{mixtral_sparse_moe_block.1} parent=1 // loop_body
      %s24 = ssub.s32 %s19, 1
      %s25 = ssub.s32 %s19, 2
      %s35 = sadd.s32 1, %s28
      %p36 = scmp.ge.s32.totalorder %s35, 1
      %s37 = scalar_select %p36, 0, %s35
      %s38 = sadd.s32 1, %s27
      %s39 = scalar_select %p36, %s38, %s27
      %p40 = scmp.ge.s32.totalorder %s39, 4
      %s41 = scalar_select %p40, 0, %s39
      %s42 = sadd.s32 1, %s26
      %s43 = scalar_select %p40, %s42, %s26
      %p44 = scmp.ge.s32.totalorder %s43, 1
      %s45 = scalar_select %p44, 0, %s43
      %s46 = ssub.s32 %s26, %s45
      %p47 = scmp.eq.s32.totalorder %s46, 0
      %s49 = sadd.s32 %s48, 1
      %s50 = scalar_select %p47, %s48, %s49
      %p53 = pneg %p47
      %p54 = scmp.eq.s32.totalorder %s19, 3
      %p55 = por %p53, %p54
      %p56 = scmp.ne.s32.totalorder %s48, %s51
      %p57 = scmp.eq.s32.totalorder %s19, 0
      %p58 = por %p56, %p57
      %p59 = scmp.ne.s32.totalorder %s48, %s51
      %p60 = scmp.eq.s32.totalorder %s24, 3
      %p61 = por %p59, %p60
      %p62 = scmp.ne.s32.totalorder %s51, %s52
      %p63 = scmp.eq.s32.totalorder %s24, 0
      %p64 = por %p62, %p63
      %p65 = scmp.ne.s32.totalorder %s51, %s52
      %p66 = scmp.eq.s32.totalorder %s25, 3
      %p67 = por %p65, %p66
      %p69 = scmp.ne.s32.totalorder %s52, %s68
      %p70 = scmp.eq.s32.totalorder %s25, 0
      %p71 = por %p69, %p70
      %s72 = ssub.s32 %s27, %s41
      %s73 = ssub.s32 %s28, %s37
      %s74 = sor.u32 %s72, %s73
      %p75 = scmp.eq.s32.totalorder %s74, 0
      %s77 = sadd.s32 %s76, 1
      %s78 = scalar_select %p75, %s76, %s77
      %p81 = pneg %p75
      %p82 = scmp.eq.s32.totalorder %s19, 3
      %p83 = por %p81, %p82
      %p84 = scmp.ne.s32.totalorder %s76, %s79
      %p85 = scmp.eq.s32.totalorder %s19, 0
      %p86 = por %p84, %p85
      %p87 = scmp.ne.s32.totalorder %s76, %s79
      %p88 = scmp.eq.s32.totalorder %s24, 3
      %p89 = por %p87, %p88
      %p90 = scmp.ne.s32.totalorder %s79, %s80
      %p91 = scmp.eq.s32.totalorder %s24, 0
      %p92 = por %p90, %p91
      %p93 = scmp.ne.s32.totalorder %s79, %s80
      %p94 = scmp.eq.s32.totalorder %s25, 3
      %p95 = por %p93, %p94
      %p97 = scmp.ne.s32.totalorder %s80, %s96
      %p98 = scmp.eq.s32.totalorder %s25, 0
      %p99 = por %p97, %p98
      %s100 = ssub.s32 %s27, %s41
      %s101 = ssub.s32 %s28, %s37
      %s102 = sor.u32 %s100, %s101
      %p103 = scmp.eq.s32.totalorder %s102, 0
      %s105 = sadd.s32 %s104, 1
      %s106 = scalar_select %p103, %s104, %s105
      %p109 = pneg %p103
      %p110 = scmp.eq.s32.totalorder %s19, 3
      %p111 = por %p109, %p110
      %p112 = scmp.ne.s32.totalorder %s104, %s107
      %p113 = scmp.eq.s32.totalorder %s19, 0
      %p114 = por %p112, %p113
      %p115 = scmp.ne.s32.totalorder %s104, %s107
      %p116 = scmp.eq.s32.totalorder %s24, 3
      %p117 = por %p115, %p116
      %p118 = scmp.ne.s32.totalorder %s107, %s108
      %p119 = scmp.eq.s32.totalorder %s24, 0
      %p120 = por %p118, %p119
      %p121 = scmp.ne.s32.totalorder %s107, %s108
      %p122 = scmp.eq.s32.totalorder %s25, 3
      %p123 = por %p121, %p122
      %p125 = scmp.ne.s32.totalorder %s108, %s124
      %p126 = scmp.eq.s32.totalorder %s25, 0
      %p127 = por %p125, %p126
      %s128 = ssub.s32 %s27, %s41
      %s129 = ssub.s32 %s28, %s37
      %s130 = sor.u32 %s128, %s129
      %p131 = scmp.eq.s32.totalorder %s130, 0
      %s133 = sadd.s32 %s132, 1
      %s134 = scalar_select %p131, %s132, %s133
      %p137 = pneg %p131
      %p138 = scmp.eq.s32.totalorder %s19, 3
      %p139 = por %p137, %p138
      %p140 = scmp.ne.s32.totalorder %s132, %s135
      %p141 = scmp.eq.s32.totalorder %s19, 0
      %p142 = por %p140, %p141
      %p143 = scmp.ne.s32.totalorder %s132, %s135
      %p144 = scmp.eq.s32.totalorder %s24, 3
      %p145 = por %p143, %p144
      %p146 = scmp.ne.s32.totalorder %s135, %s136
      %p147 = scmp.eq.s32.totalorder %s24, 0
      %p148 = por %p146, %p147
      %p149 = scmp.ne.s32.totalorder %s135, %s136
      %p150 = scmp.eq.s32.totalorder %s25, 3
      %p151 = por %p149, %p150
      %p153 = scmp.ne.s32.totalorder %s136, %s152
      %p154 = scmp.eq.s32.totalorder %s25, 0
      %p155 = por %p153, %p154
      %s156 = ssub.s32 %s27, %s41
      %s157 = ssub.s32 %s26, %s45
      %s158 = sor.u32 %s156, %s157
      %p159 = scmp.eq.s32.totalorder %s158, 0
      %s161 = sadd.s32 %s160, 1
      %s162 = scalar_select %p159, %s160, %s161
      %p165 = pneg %p159
      %p166 = scmp.eq.s32.totalorder %s19, 3
      %p167 = por %p165, %p166
      %p168 = scmp.ne.s32.totalorder %s160, %s163
      %p169 = scmp.eq.s32.totalorder %s19, 0
      %p170 = por %p168, %p169
      %p171 = scmp.ne.s32.totalorder %s160, %s163
      %p172 = scmp.eq.s32.totalorder %s24, 3
      %p173 = por %p171, %p172
      %p174 = scmp.ne.s32.totalorder %s163, %s164
      %p175 = scmp.eq.s32.totalorder %s24, 0
      %p176 = por %p174, %p175
      %p177 = scmp.ne.s32.totalorder %s163, %s164
      %p178 = scmp.eq.s32.totalorder %s25, 3
      %p179 = por %p177, %p178
      %p181 = scmp.ne.s32.totalorder %s164, %s180
      %p182 = scmp.eq.s32.totalorder %s25, 0
      %p183 = por %p181, %p182
      %s184 = ssub.s32 %s26, %s45
      %p185 = scmp.eq.s32.totalorder %s184, 0
      %s187 = sadd.s32 %s186, 1
      %s188 = scalar_select %p185, %s186, %s187
      %p191 = pneg %p185
      %p192 = scmp.eq.s32.totalorder %s19, 3
      %p193 = por %p191, %p192
      %p194 = scmp.ne.s32.totalorder %s186, %s189
      %p195 = scmp.eq.s32.totalorder %s19, 0
      %p196 = por %p194, %p195
      %p197 = scmp.ne.s32.totalorder %s186, %s189
      %p198 = scmp.eq.s32.totalorder %s24, 3
      %p199 = por %p197, %p198
      %p200 = scmp.ne.s32.totalorder %s189, %s190
      %p201 = scmp.eq.s32.totalorder %s24, 0
      %p202 = por %p200, %p201
      %p203 = scmp.ne.s32.totalorder %s189, %s190
      %p204 = scmp.eq.s32.totalorder %s25, 3
      %p205 = por %p203, %p204
      %p207 = scmp.ne.s32.totalorder %s190, %s206
      %p208 = scmp.eq.s32.totalorder %s25, 0
      %p209 = por %p207, %p208
      %p210 = scmp.le.s32.totalorder 1, %s19
      %p211 = scmp.lt.s32.totalorder %s19, 5
      %p212 = pnand %p210, %p211
      %p213 = pneg %p212
      // Predicated region
      $region9: #{mixtral_sparse_moe_block.1} parent=5 // pred_check
        _
      $region10: #{mixtral_sparse_moe_block.1} parent=5 // pred_check_branch
        %215 = sbr.rel (%p212) target = $region12
      $region11: #{mixtral_sparse_moe_block.1} parent=5 // pred_region
        %s216 = ssub.s32 %s19, 1
        // Predicated region
        $region13: #{mixtral_sparse_moe_block.1} parent=11 // pred_check
          %p217 = pneg %p64
        $region14: #{mixtral_sparse_moe_block.1} parent=11 // pred_check_branch
          %219 = sbr.rel (%p217) target = $region16
        $region15: #{mixtral_sparse_moe_block.1} parent=11 // pred_region
          %s220 = smul.u32 2, %s29
          %p221 = scmp.lt.s32.totalorder %s220, 1
          %s222 = scalar_select %p221, %s220, 1
          %s223 = smul.addr %s222, 4
          %s224 = scalar_lea.vmem %s1, %s223
          %s225 = smul.u32 2, %s29
        $region16: #{mixtral_sparse_moe_block.1} parent=11 // pred_fallthru
          _
      $region12: #{mixtral_sparse_moe_block.1} parent=5 // pred_fallthru
        _
      %p226 = scmp.lt.s32.totalorder %s19, 4
      // Predicated region
      $region17: #{mixtral_sparse_moe_block.1} parent=5 // pred_check
        %p227 = pneg %p226
      $region18: #{mixtral_sparse_moe_block.1} parent=5 // pred_check_branch
        %229 = sbr.rel (%p227) target = $region20
      $region19: #{mixtral_sparse_moe_block.1} parent=5 // pred_region
        // Predicated region
        $region21: #{mixtral_sparse_moe_block.1} parent=19 // pred_check
          %p230 = pneg %p86
        $region22: #{mixtral_sparse_moe_block.1} parent=19 // pred_check_branch
          %232 = sbr.rel (%p230) target = $region24
        $region23: #{mixtral_sparse_moe_block.1} parent=19 // pred_region
          %p233 = scmp.lt.s32.totalorder %s27, 3
          %s234 = scalar_select %p233, %s27, 3
          %p235 = scmp.lt.s32.totalorder %s28, 0
          %s236 = scalar_select %p235, %s28, 0
          %s237 = smul.addr %s234, 4
          %s238 = sadd.s32 %s236, %s237
          %s239 = smul.addr %s238, 4
          %s240 = scalar_lea.vmem %s2, %s239
        $region24: #{mixtral_sparse_moe_block.1} parent=19 // pred_fallthru
          _
        // Predicated region
        $region25: #{mixtral_sparse_moe_block.1} parent=19 // pred_check
          %p241 = pneg %p114
        $region26: #{mixtral_sparse_moe_block.1} parent=19 // pred_check_branch
          %243 = sbr.rel (%p241) target = $region28
        $region27: #{mixtral_sparse_moe_block.1} parent=19 // pred_region
          %p244 = scmp.lt.s32.totalorder %s27, 3
          %s245 = scalar_select %p244, %s27, 3
          %p246 = scmp.lt.s32.totalorder %s28, 0
          %s247 = scalar_select %p246, %s28, 0
          %s248 = smul.addr %s245, 4
          %s249 = sadd.s32 %s247, %s248
          %s250 = smul.addr %s249, 4
          %s251 = scalar_lea.vmem %s3, %s250
        $region28: #{mixtral_sparse_moe_block.1} parent=19 // pred_fallthru
          _
        // Predicated region
        $region29: #{mixtral_sparse_moe_block.1} parent=19 // pred_check
          %p252 = pneg %p142
        $region30: #{mixtral_sparse_moe_block.1} parent=19 // pred_check_branch
          %254 = sbr.rel (%p252) target = $region32
        $region31: #{mixtral_sparse_moe_block.1} parent=19 // pred_region
          %s255 = smul.u32 8, %s28
          %p256 = scmp.lt.s32.totalorder %s27, 3
          %s257 = scalar_select %p256, %s27, 3
          %p258 = scmp.lt.s32.totalorder %s255, 7
          %s259 = scalar_select %p258, %s255, 7
          %s260 = smul.addr %s257, 8
          %s261 = sadd.s32 %s259, %s260
          %s262 = smul.addr %s261, 4
          %s263 = scalar_lea.vmem %s4, %s262
          %s264 = smul.u32 8, %s28
        $region32: #{mixtral_sparse_moe_block.1} parent=19 // pred_fallthru
          _
        // Predicated region
        $region33: #{mixtral_sparse_moe_block.1} parent=19 // pred_check
          %p265 = pneg %p170
        $region34: #{mixtral_sparse_moe_block.1} parent=19 // pred_check_branch
          %267 = sbr.rel (%p265) target = $region36
        $region35: #{mixtral_sparse_moe_block.1} parent=19 // pred_region
          %s268 = smul.u32 2, %s26
          %p269 = scmp.lt.s32.totalorder %s27, 3
          %s270 = scalar_select %p269, %s27, 3
          %p271 = scmp.lt.s32.totalorder %s268, 1
          %s272 = scalar_select %p271, %s268, 1
          %s273 = smul.addr %s270, 2
          %s274 = sadd.s32 %s272, %s273
          %s275 = smul.addr %s274, 8
          %s276 = scalar_lea.vmem %s5, %s275
          %s277 = smul.u32 2, %s26
        $region36: #{mixtral_sparse_moe_block.1} parent=19 // pred_fallthru
          _
      $region20: #{mixtral_sparse_moe_block.1} parent=5 // pred_fallthru
        _
      %p278 = scmp.le.s32.totalorder 1, %s19
      %p279 = scmp.lt.s32.totalorder %s19, 5
      %p280 = pnand %p278, %p279
      %p281 = pneg %p280
      // Predicated region
      $region37: #{mixtral_sparse_moe_block.1} parent=5 // pred_check
        _
      $region38: #{mixtral_sparse_moe_block.1} parent=5 // pred_check_branch
        %283 = sbr.rel (%p280) target = $region40
      $region39: #{mixtral_sparse_moe_block.1} parent=5 // pred_region
        %s284 = ssub.s32 %s19, 1
        %s285 = smul.u32 2, %s29
        %p286 = scmp.lt.s32.totalorder %s285, 1
        %s287 = scalar_select %p286, %s285, 1
        %s288 = smul.addr %s287, 4
        %s289 = scalar_lea.vmem %s1, %s288
        %p290 = pneg %p64
        %p291 = pneg %p61
        %p292 = scmp.lt.s32.totalorder %s30, 3
        %s293 = scalar_select %p292, %s30, 3
        %p294 = scmp.lt.s32.totalorder %s31, 0
        %s295 = scalar_select %p294, %s31, 0
        %s296 = smul.addr %s293, 4
        %s297 = sadd.s32 %s295, %s296
        %s298 = smul.addr %s297, 4
        %s299 = scalar_lea.vmem %s2, %s298
        %p300 = pneg %p92
        %p301 = pneg %p89
        %p302 = scmp.lt.s32.totalorder %s30, 3
        %s303 = scalar_select %p302, %s30, 3
        %p304 = scmp.lt.s32.totalorder %s31, 0
        %s305 = scalar_select %p304, %s31, 0
        %s306 = smul.addr %s303, 4
        %s307 = sadd.s32 %s305, %s306
        %s308 = smul.addr %s307, 4
        %s309 = scalar_lea.vmem %s3, %s308
        %p310 = pneg %p120
        %p311 = pneg %p117
        %s312 = smul.u32 8, %s31
        %p313 = scmp.lt.s32.totalorder %s30, 3
        %s314 = scalar_select %p313, %s30, 3
        %p315 = scmp.lt.s32.totalorder %s312, 7
        %s316 = scalar_select %p315, %s312, 7
        %s317 = smul.addr %s314, 8
        %s318 = sadd.s32 %s316, %s317
        %s319 = smul.addr %s318, 4
        %s320 = scalar_lea.vmem %s4, %s319
        %p321 = pneg %p148
        %p322 = pneg %p145
        %s323 = smul.u32 2, %s29
        %p324 = scmp.lt.s32.totalorder %s30, 3
        %s325 = scalar_select %p324, %s30, 3
        %p326 = scmp.lt.s32.totalorder %s323, 1
        %s327 = scalar_select %p326, %s323, 1
        %s328 = smul.addr %s325, 2
        %s329 = sadd.s32 %s327, %s328
        %s330 = smul.addr %s329, 8
        %s331 = scalar_lea.vmem %s5, %s330
        %p332 = pneg %p176
        %p333 = pneg %p173
        %p334 = pneg %p202
        %p335 = pneg %p199
        %s336 = smul.u32 2, %s29
        %p337 = scmp.lt.s32.totalorder %s336, 1
        %s338 = scalar_select %p337, %s336, 1
        %s339 = smul.addr %s338, 4
        %s340 = scalar_lea.vmem %s1, %s339
        %s341 = smul.u32 2, %s29
        %p342 = scmp.lt.s32.totalorder %s30, 3
        %s343 = scalar_select %p342, %s30, 3
        %p344 = scmp.lt.s32.totalorder %s31, 0
        %s345 = scalar_select %p344, %s31, 0
        %s346 = smul.addr %s343, 4
        %s347 = sadd.s32 %s345, %s346
        %s348 = smul.addr %s347, 4
        %s349 = scalar_lea.vmem %s2, %s348
        %p350 = scmp.lt.s32.totalorder %s30, 3
        %s351 = scalar_select %p350, %s30, 3
        %p352 = scmp.lt.s32.totalorder %s31, 0
        %s353 = scalar_select %p352, %s31, 0
        %s354 = smul.addr %s351, 4
        %s355 = sadd.s32 %s353, %s354
        %s356 = smul.addr %s355, 4
        %s357 = scalar_lea.vmem %s3, %s356
        %s358 = smul.u32 8, %s31
        %p359 = scmp.lt.s32.totalorder %s30, 3
        %s360 = scalar_select %p359, %s30, 3
        %p361 = scmp.lt.s32.totalorder %s358, 7
        %s362 = scalar_select %p361, %s358, 7
        %s363 = smul.addr %s360, 8
        %s364 = sadd.s32 %s362, %s363
        %s365 = smul.addr %s364, 4
        %s366 = scalar_lea.vmem %s4, %s365
        %s367 = smul.u32 8, %s31
        %s368 = smul.u32 2, %s29
        %p369 = scmp.lt.s32.totalorder %s30, 3
        %s370 = scalar_select %p369, %s30, 3
        %p371 = scmp.lt.s32.totalorder %s368, 1
        %s372 = scalar_select %p371, %s368, 1
        %s373 = smul.addr %s370, 2
        %s374 = sadd.s32 %s372, %s373
        %s375 = smul.addr %s374, 8
        %s376 = scalar_lea.vmem %s5, %s375
        %s377 = smul.u32 2, %s29
        %s378 = smul.u32 2, %s29
        %p380 = scmp.eq.s32.totalorder %s30, 0
        %p381 = scmp.eq.s32.totalorder %s31, 0
        %p382 = pnand %p380, %p381
        %p383 = pneg %p382
        // Predicated region
        $region41: #{mixtral_sparse_moe_block.1} parent=39 // pred_check
          _
        $region42: #{mixtral_sparse_moe_block.1} parent=39 // pred_check_branch
          %385 = sbr.rel (%p382) target = $region44
        $region43: #{mixtral_sparse_moe_block.1} parent=39 // pred_region
          %vm386 = vcmask 261120
          %387 = vst.msk [vmem:[#allocation2] sm:$0xff] %vm386, 0.0
          %388 = vst.msk [vmem:[#allocation2 + $0x8] sm:$0xff] %vm386, 0.0
        $region44: #{mixtral_sparse_moe_block.1} parent=39 // pred_fallthru
          _
        %s389 = smul.u32 %s29, 4
        %s390 = sadd.s32 %s389, %s30
        %s391 = sld [smem:[#allocation4 + %s390]]
        %p392 = scmp.gt.s32.totalorder %s391, 0
        // Predicated region
        $region45: #{mixtral_sparse_moe_block.1} parent=39 // pred_check
          %p393 = pneg %p392
        $region46: #{mixtral_sparse_moe_block.1} parent=39 // pred_check_branch
          %395 = sbr.rel (%p393) target = $region48
        $region47: #{mixtral_sparse_moe_block.1} parent=39 // pred_region
          %v396 = vld [vmem:[%s340] sm:$0xf]
          %v397 = vld [vmem:[%s340 + $0x4] sm:$0xf]
          %v398 = vld [vmem:[%s349] sm:$0xf]
          %v399 = vld [vmem:[%s349 + $0x4] sm:$0xf]
          %v400 = vld [vmem:[%s349 + $0x8] sm:$0xf]
          %v401 = vld [vmem:[%s349 + $0xc] sm:$0xf]
          %v404 = vunpack.c.l.b16 %v396
          %v405 = vunpack.c.l.b16 %v397
          %v406 = vpack.c.b16 %v405, %v404
          %v411 = vunpack.c.l.b16 %v398
          %v412 = vunpack.c.l.b16 %v399
          %v413 = vunpack.c.l.b16 %v400
          %v414 = vunpack.c.l.b16 %v401
          %v415 = vpack.c.b16 %v412, %v411
          %v416 = vpack.c.b16 %v414, %v413
          %vm419 = vcmask 261120
          %v421 = vsel %vm419, %v406, 0
          %423 = vmatprep.subr.bf16.mxu0 0
          %424 = vmatpush1.bf16.msra.mxu0 %v415
          %425 = vmatprep.subr.bf16.mxu0 0
          %426 = vmatpush1.bf16.msra.mxu0 %v416
          %427 = vmatprep.subr.bf16.mxu0 0
          %428 = vmatpush1.bf16.msra.mxu0 0
          %429 = vmatprep.subr.bf16.mxu0 0
          %430 = vmatpush1.bf16.msra.mxu0 0
          %431 = vmatprep.subr.bf16.mxu0 0
          %432 = vmatpush1.bf16.msra.mxu0 0
          %433 = vmatprep.subr.bf16.mxu0 0
          %434 = vmatpush1.bf16.msra.mxu0 0
          %435 = vmatprep.subr.bf16.mxu0 0
          %436 = vmatpush1.bf16.msra.mxu0 0
          %437 = vmatprep.subr.bf16.mxu0 0
          %438 = vmatpush1.bf16.msra.mxu0 0
          %439 = vmatprep.subr.bf16.mxu0 0
          %440 = vmatpush1.bf16.msra.mxu0 0
          %441 = vmatprep.subr.bf16.mxu0 0
          %442 = vmatpush1.bf16.msra.mxu0 0
          %443 = vmatprep.subr.bf16.mxu0 0
          %444 = vmatpush1.bf16.msra.mxu0 0
          %445 = vmatprep.subr.bf16.mxu0 0
          %446 = vmatpush1.bf16.msra.mxu0 0
          %447 = vmatprep.subr.bf16.mxu0 0
          %448 = vmatpush1.bf16.msra.mxu0 0
          %449 = vmatprep.subr.bf16.mxu0 0
          %450 = vmatpush1.bf16.msra.mxu0 0
          %451 = vmatprep.subr.bf16.mxu0 0
          %452 = vmatpush1.bf16.msra.mxu0 0
          %453 = vmatprep.subr.bf16.mxu0 0
          %454 = vmatpush1.bf16.msra.mxu0 0
          %455 = vmatprep.mubr.bf16.mxu0 0
          %456 = vmatmul.mubr.bf16.gmra.mrb[0].mxu0 %v421
          %v457 = vpop.f32.mrb[0].mxu0
          %v458 = vadd.f32 0.0, %v457
          %v459 = vpop.f32.mrb[0].mxu0
          %v460 = vpop.f32.mrb[0].mxu0
          %v461 = vadd.f32 0.0, %v460
          %v462 = vpop.f32.mrb[0].mxu0
          %463 = vdwg.mxu0
          %v464 = vld [vmem:[%s357] sm:$0xf]
          %v465 = vld [vmem:[%s357 + $0x4] sm:$0xf]
          %v466 = vld [vmem:[%s357 + $0x8] sm:$0xf]
          %v467 = vld [vmem:[%s357 + $0xc] sm:$0xf]
          %v472 = vunpack.c.l.b16 %v464
          %v473 = vunpack.c.l.b16 %v465
          %v474 = vunpack.c.l.b16 %v466
          %v475 = vunpack.c.l.b16 %v467
          %v476 = vpack.c.b16 %v473, %v472
          %v477 = vpack.c.b16 %v475, %v474
          %480 = vmatprep.subr.bf16.mxu0 0
          %481 = vmatpush1.bf16.msra.mxu0 %v476
          %482 = vmatprep.subr.bf16.mxu0 0
          %483 = vmatpush1.bf16.msra.mxu0 %v477
          %484 = vmatprep.subr.bf16.mxu0 0
          %485 = vmatpush1.bf16.msra.mxu0 0
          %486 = vmatprep.subr.bf16.mxu0 0
          %487 = vmatpush1.bf16.msra.mxu0 0
          %488 = vmatprep.subr.bf16.mxu0 0
          %489 = vmatpush1.bf16.msra.mxu0 0
          %490 = vmatprep.subr.bf16.mxu0 0
          %491 = vmatpush1.bf16.msra.mxu0 0
          %492 = vmatprep.subr.bf16.mxu0 0
          %493 = vmatpush1.bf16.msra.mxu0 0
          %494 = vmatprep.subr.bf16.mxu0 0
          %495 = vmatpush1.bf16.msra.mxu0 0
          %496 = vmatprep.subr.bf16.mxu0 0
          %497 = vmatpush1.bf16.msra.mxu0 0
          %498 = vmatprep.subr.bf16.mxu0 0
          %499 = vmatpush1.bf16.msra.mxu0 0
          %500 = vmatprep.subr.bf16.mxu0 0
          %501 = vmatpush1.bf16.msra.mxu0 0
          %502 = vmatprep.subr.bf16.mxu0 0
          %503 = vmatpush1.bf16.msra.mxu0 0
          %504 = vmatprep.subr.bf16.mxu0 0
          %505 = vmatpush1.bf16.msra.mxu0 0
          %506 = vmatprep.subr.bf16.mxu0 0
          %507 = vmatpush1.bf16.msra.mxu0 0
          %508 = vmatprep.subr.bf16.mxu0 0
          %509 = vmatpush1.bf16.msra.mxu0 0
          %510 = vmatprep.subr.bf16.mxu0 0
          %511 = vmatpush1.bf16.msra.mxu0 0
          %512 = vmatprep.mubr.bf16.mxu0 0
          %513 = vmatmul.mubr.bf16.gmra.mrb[0].mxu0 %v421
          %v514 = vpop.f32.mrb[0].mxu0
          %v515 = vadd.f32 0.0, %v514
          %v516 = vpop.f32.mrb[0].mxu0
          %v517 = vpop.f32.mrb[0].mxu0
          %v518 = vadd.f32 0.0, %v517
          %v519 = vpop.f32.mrb[0].mxu0
          %520 = vdwg.mxu0
          %v521 = vxor.u32 %v458, 2147483648
          %v522 = vxor.u32 %v461, 2147483648
          %v523 = vmul.f32 %v521, 1.442695
          %v524 = vpow.pop %v523
          %v525 = vmul.f32 %v522, 1.442695
          %v526 = vpow.pop %v525
          %v527 = vadd.f32 %v524, 1.0
          %v528 = vadd.f32 %v526, 1.0
          %v529 = vrcp.pop %v527
          %v530 = vmul.f32 1.0, %v529
          %v531 = vrcp.pop %v528
          %v532 = vmul.f32 1.0, %v531
          %v533 = vmul.f32 %v458, %v530
          %v534 = vmul.f32 %v461, %v532
          %v535 = vmul.f32 %v533, %v515
          %v536 = vmul.f32 %v534, %v518
          %v537 = vld [vmem:[%s376] sm:$0xff]
          %v538 = vld [vmem:[%s376 + $0x8] sm:$0xff]
          %540 = vset.pattern.permute.xlu0 0
          %541 = vperm.xlu0 %540, %v537
          %v542 = vpop.permute.xlu0 %541
          %545 = vset.pattern.permute.xlu0 0
          %546 = vperm.xlu0 %545, %v538
          %v547 = vpop.permute.xlu0 %546
          %v549 = vmul.f32 %v535, %v542
          %v550 = vmul.f32 %v536, %v547
          %v551 = vld [vmem:[#allocation2] sm:$0xff]
          %v552 = vld [vmem:[#allocation2 + $0x8] sm:$0xff]
          %v553 = vpack.c.bf16 %v550, %v549
          %v554 = vld [vmem:[%s366] sm:$0xf]
          %v555 = vld [vmem:[%s366 + $0x4] sm:$0xf]
          %v556 = vld [vmem:[%s366 + $0x8] sm:$0xf]
          %v557 = vld [vmem:[%s366 + $0xc] sm:$0xf]
          %v558 = vld [vmem:[%s366 + $0x10] sm:$0xf]
          %v559 = vld [vmem:[%s366 + $0x14] sm:$0xf]
          %v560 = vld [vmem:[%s366 + $0x18] sm:$0xf]
          %v561 = vld [vmem:[%s366 + $0x1c] sm:$0xf]
          %v570 = vunpack.c.l.b16 %v554
          %v571 = vunpack.c.l.b16 %v555
          %v572 = vunpack.c.l.b16 %v556
          %v573 = vunpack.c.l.b16 %v557
          %v574 = vunpack.c.l.b16 %v558
          %v575 = vunpack.c.l.b16 %v559
          %v576 = vunpack.c.l.b16 %v560
          %v577 = vunpack.c.l.b16 %v561
          %v578 = vpack.c.b16 %v571, %v570
          %v579 = vpack.c.b16 %v573, %v572
          %v580 = vpack.c.b16 %v575, %v574
          %v581 = vpack.c.b16 %v577, %v576
          %vm586 = vcmask 523264
          %v588 = vsel %vm586, %v553, 0
          %590 = vmatprep.subr.bf16.mxu0 0
          %591 = vmatpush1.bf16.msra.mxu0 %v578
          %592 = vmatprep.subr.bf16.mxu0 0
          %593 = vmatpush1.bf16.msra.mxu0 %v579
          %594 = vmatprep.subr.bf16.mxu0 0
          %595 = vmatpush1.bf16.msra.mxu0 %v580
          %596 = vmatprep.subr.bf16.mxu0 0
          %597 = vmatpush1.bf16.msra.mxu0 %v581
          %598 = vmatprep.subr.bf16.mxu0 0
          %599 = vmatpush1.bf16.msra.mxu0 0
          %600 = vmatprep.subr.bf16.mxu0 0
          %601 = vmatpush1.bf16.msra.mxu0 0
          %602 = vmatprep.subr.bf16.mxu0 0
          %603 = vmatpush1.bf16.msra.mxu0 0
          %604 = vmatprep.subr.bf16.mxu0 0
          %605 = vmatpush1.bf16.msra.mxu0 0
          %606 = vmatprep.subr.bf16.mxu0 0
          %607 = vmatpush1.bf16.msra.mxu0 0
          %608 = vmatprep.subr.bf16.mxu0 0
          %609 = vmatpush1.bf16.msra.mxu0 0
          %610 = vmatprep.subr.bf16.mxu0 0
          %611 = vmatpush1.bf16.msra.mxu0 0
          %612 = vmatprep.subr.bf16.mxu0 0
          %613 = vmatpush1.bf16.msra.mxu0 0
          %614 = vmatprep.subr.bf16.mxu0 0
          %615 = vmatpush1.bf16.msra.mxu0 0
          %616 = vmatprep.subr.bf16.mxu0 0
          %617 = vmatpush1.bf16.msra.mxu0 0
          %618 = vmatprep.subr.bf16.mxu0 0
          %619 = vmatpush1.bf16.msra.mxu0 0
          %620 = vmatprep.subr.bf16.mxu0 0
          %621 = vmatpush1.bf16.msra.mxu0 0
          %622 = vmatprep.mubr.bf16.mxu0 0
          %623 = vmatmul.mubr.bf16.gmra.mrb[0].mxu0 %v588
          %v624 = vpop.f32.mrb[0].mxu0
          %v625 = vadd.f32 0.0, %v624
          %v626 = vpop.f32.mrb[0].mxu0
          %v627 = vpop.f32.mrb[0].mxu0
          %v628 = vadd.f32 0.0, %v627
          %v629 = vpop.f32.mrb[0].mxu0
          %630 = vdwg.mxu0
          %v631 = vadd.f32 %v551, %v625
          %v632 = vadd.f32 %v552, %v628
          %633 = vst.msk [vmem:[#allocation2] sm:$0xff] %vm419, %v631
          %634 = vst.msk [vmem:[#allocation2 + $0x8] sm:$0xff] %vm419, %v632
        $region48: #{mixtral_sparse_moe_block.1} parent=39 // pred_fallthru
          _
        %p635 = scmp.eq.s32.totalorder %s30, 3
        %p636 = pnand %p635, %p381
        %p637 = pneg %p636
        // Predicated region
        $region49: #{mixtral_sparse_moe_block.1} parent=39 // pred_check
          _
        $region50: #{mixtral_sparse_moe_block.1} parent=39 // pred_check_branch
          %639 = sbr.rel (%p636) target = $region52
        $region51: #{mixtral_sparse_moe_block.1} parent=39 // pred_region
          %v640 = vld [vmem:[#allocation2] sm:$0xff]
          %v641 = vld [vmem:[#allocation2 + $0x8] sm:$0xff]
          %vm642 = vcmask 261120
          %643 = vst.msk [vmem:[#allocation5] sm:$0xff] %vm642, %v640
          %644 = vst.msk [vmem:[#allocation5 + $0x8] sm:$0xff] %vm642, %v641
        $region52: #{mixtral_sparse_moe_block.1} parent=39 // pred_fallthru
          _
        // Predicated region
        $region53: #{mixtral_sparse_moe_block.1} parent=39 // pred_check
          %p645 = pneg %p199
        $region54: #{mixtral_sparse_moe_block.1} parent=39 // pred_check_branch
          %647 = sbr.rel (%p645) target = $region56
        $region55: #{mixtral_sparse_moe_block.1} parent=39 // pred_region
          %s648 = smul.u32 2, %s29
          %s650 = ssub.s32 256, 256
          %651 = vsyncadd [#allocation6], %s650
          %s652 = smul.addr %s648, 128
          %s653 = scalar_lea.hbm %s6, %s652
          %s654 = sshll.u32 [#allocation5], 4
          %s655 = int_to_ptr.vmem [resolvable:$true] %s654
          %660 = dma.vmem_to_hbm [thread:$0]  %s655, 256, %s653, [#allocation6], 128, 128, 8
        $region56: #{mixtral_sparse_moe_block.1} parent=39 // pred_fallthru
          _
        // Predicated region
        $region57: #{mixtral_sparse_moe_block.1} parent=39 // pred_check
          %p661 = pneg %p199
        $region58: #{mixtral_sparse_moe_block.1} parent=39 // pred_check_branch
          %663 = sbr.rel (%p661) target = $region60
        $region59: #{mixtral_sparse_moe_block.1} parent=39 // pred_region
          %664 = dma.done [#allocation6], 256
        $region60: #{mixtral_sparse_moe_block.1} parent=39 // pred_fallthru
          _
      $region40: #{mixtral_sparse_moe_block.1} parent=5 // pred_fallthru
        _
      %p665 = scmp.le.s32.totalorder 2, %s19
      // Predicated region
      $region61: #{mixtral_sparse_moe_block.1} parent=5 // pred_check
        %p666 = pneg %p665
      $region62: #{mixtral_sparse_moe_block.1} parent=5 // pred_check_branch
        %668 = sbr.rel (%p666) target = $region64
      $region63: #{mixtral_sparse_moe_block.1} parent=5 // pred_region
        %s669 = ssub.s32 %s19, 2
      $region64: #{mixtral_sparse_moe_block.1} parent=5 // pred_fallthru
        _
    $region6: #{mixtral_sparse_moe_block.1} parent=1 // loop_footer
      %s23 = sadd.s32 1, %s19
    $region7: #{mixtral_sparse_moe_block.1} parent=1 // loop_footer_branch
      %18 = sbr.rel target = $region3
    $region8: #{mixtral_sparse_moe_block.1} parent=1 // loop_exit
      _
    %670 = vsyncpa [#allocation6], 1
    %s671 = scalar_lea.sflag [#allocation6], 1
    %672 = vsyncpa %s671, 1

</llo_original>
